<compile_context>
chip_gen: v5e
topology: v5e:2x2
jax: 0.10.0
libtpu: 0.0.40
codegen_flags: <defaults>
</compile_context>

<pallas_src>
import numpy as np
import jax
import jax.numpy as jnp
from jax.experimental import pallas as pl
from jax.experimental.pallas import tpu as pltpu


def _hamiltonian_kernel(xT_ref, w1_ref, w2_ref, gaug_ref, c_ref, out_ref):
    D = c_ref.shape[0]                                 # dim of q / p
    T = c_ref.shape[1]                                 # D*(D+1)/2

    xT = xT_ref[...]                                   # (2D+1, Bt): [q^T ; p^T ; 1]
    pT = xT[D:2 * D, :]                                # (D, Bt)

    # ---- fused layer 1 (bias folded via the constant-1 row of xT): one matmul + one tanh ----
    h = jnp.tanh(jnp.dot(w1_ref[...], xT,
                         preferred_element_type=jnp.float32))          # (2H, Bt)

    # ---- fused layer 2 (block-diagonal, no bias): rows 0..T-1 = tri_raw^T, row T = V^T ----
    z = jnp.dot(w2_ref[...], h, preferred_element_type=jnp.float32)    # (T+1, Bt)
    tri_raw = z[:T, :]                                                  # (T, Bt)
    v = z[T:T + 1, :]                                                   # (1, Bt)

    # ---- kinetic energy: p^T (m m^T + eps I) p = ||m^T p||^2 + eps ||p||^2 ----
    # pga[:T]  = pg,  pg[k,b] = p[b, row_k]
    # pga[T:]  = A @ p^T  (exact contribution of the folded layer-2 bias b2m)
    pga = jnp.dot(gaug_ref[...], pT, preferred_element_type=jnp.float32)   # (T+D, Bt)
    pg = pga[:T, :]
    y_bias = pga[T:, :]
    y = jnp.dot(c_ref[...], tri_raw * pg,
                preferred_element_type=jnp.float32) + y_bias               # (D, Bt)
    t_kin = (jnp.sum(y * y, axis=0, keepdims=True)
             + 1e-5 * jnp.sum(pT * pT, axis=0, keepdims=True))             # (1, Bt)

    out_ref[...] = (v + t_kin).astype(out_ref.dtype)   # lane-dense (1, Bt) store


def _num_tensorcores():
    """Best-effort TensorCore count (v7x has 2 per chip); default to 1 (v5e/v6e)."""
    try:
        info = pltpu.get_tpu_info()
        for attr in ("num_cores", "core_count", "tensor_core_count", "num_tensorcores"):
            n = getattr(info, attr, None)
            if isinstance(n, int) and n > 0:
                return n
    except Exception:
        pass
    return 1


def _choose_blocking(B, num_tc):
    """Lane-dense block size: one grid step per TensorCore, blocks multiple of 128, <= 512."""
    steps = max(1, int(num_tc))
    bb = -(-B // steps)                 # cdiv
    bb = max(128, -(-bb // 128) * 128)  # round up to a multiple of 128
    bb = min(bb, 512)                   # cap f32 vreg pressure of the (2H, Bt) live set
    steps = -(-B // bb)
    return bb, steps, steps * bb


def constrained_hamiltonian(x, packed, *, num_tensorcores=None):
    """x: (B, 2*D) float32.  packed: output of pack_params.  Returns (B, 1) float32."""
    B, two_d = x.shape
    D = two_d // 2
    if num_tensorcores is None:
        num_tensorcores = _num_tensorcores()
    block_b, steps, b_pad = _choose_blocking(B, num_tensorcores)

    w1, w2, gaug, cmat = (packed[k] for k in ("w1", "w2", "Gaug", "C"))
    H2 = w1.shape[0]           # 2 * hidden
    Tp1 = w2.shape[0]          # T + 1
    T = cmat.shape[1]          # D*(D+1)/2

    # layout plumbing in plain JAX: fused [q^T ; p^T ; 1] with batch on the lane axis
    xT = jnp.transpose(x)                              # (2D, B)
    if b_pad != B:
        xT = jnp.pad(xT, ((0, 0), (0, b_pad - B)))     # keep lane dim a multiple of 128
    xT = jnp.concatenate([xT, jnp.ones((1, b_pad), jnp.float32)], axis=0)  # (2D+1, b_pad)

    full_spec = lambda shape: pl.BlockSpec(shape, lambda i: (0, 0))

    out = pl.pallas_call(
        _hamiltonian_kernel,
        out_shape=jax.ShapeDtypeStruct((1, b_pad), jnp.float32),
        grid_spec=pltpu.PrefetchScalarGridSpec(
            num_scalar_prefetch=0,
            grid=(steps,),
            in_specs=[
                pl.BlockSpec((2 * D + 1, block_b), lambda i: (0, i)),  # fused [q^T; p^T; 1]
                full_spec((H2, 2 * D + 1)),   # fused layer-1 weight (b1 folded)
                full_spec((Tp1, H2)),         # fused layer-2 weight (block-diag, no bias)
                full_spec((T + D, D)),        # [G ; A]: row-gather one-hot + folded b2m
                full_spec((D, T)),            # C: col-scatter one-hot
            ],
            out_specs=pl.BlockSpec((1, block_b), lambda i: (0, i)),
        ),
        compiler_params=pltpu.CompilerParams(
            dimension_semantics=("parallel",)),
    )(xT, w1, w2, gaug, cmat)

    return out[0, :B].reshape(B, 1)


def make_params(key, D, H):
    """Deterministic synthetic parameters, stored (in, out) like `x @ W + b`."""
    T = D * (D + 1) // 2
    ks = jax.random.split(key, 7)
    scale = 0.3
    return {
        "w1v": scale * jax.random.normal(ks[0], (D, H), jnp.float32),
        "b1v": scale * jax.random.normal(ks[1], (1, H), jnp.float32),
        "w2v": scale * jax.random.normal(ks[2], (H, 1), jnp.float32),
        "w1m": scale * jax.random.normal(ks[3], (D, H), jnp.float32),
        "b1m": scale * jax.random.normal(ks[4], (1, H), jnp.float32),
        "w2m": scale * jax.random.normal(ks[5], (H, T), jnp.float32),
        "b2m": scale * jax.random.normal(ks[6], (1, T), jnp.float32),
    }


def pack_params(params, D):
    """Fuse/transpose weights once for the lane-dense (batch-on-lanes) kernel."""
    w1v, b1v, w2v = params["w1v"], params["b1v"], params["w2v"]
    w1m, b1m, w2m, b2m = params["w1m"], params["b1m"], params["w2m"], params["b2m"]
    H = w1v.shape[1]
    T = w2m.shape[1]

    # fused layer 1 with b1 folded: columns 0..D-1 act on q^T, D..2D-1 (zeros) on p^T,
    # column 2D multiplies the constant-1 row.  Rows 0..H-1 -> V-head, H..2H-1 -> PSD-head.
    zH = jnp.zeros((H, D), jnp.float32)
    w1 = jnp.concatenate([
        jnp.concatenate([w1v.T, zH, b1v.T], axis=1),
        jnp.concatenate([w1m.T, zH, b1m.T], axis=1),
    ], axis=0)                                                               # (2H, 2D+1)

    # fused layer 2 (block-diagonal, bias-free): rows 0..T-1 = tri_raw head, row T = V head
    top = jnp.concatenate([jnp.zeros((T, H), jnp.float32), w2m.T], axis=1)   # (T, 2H)
    bot = jnp.concatenate([w2v.T, jnp.zeros((1, H), jnp.float32)], axis=1)   # (1, 2H)
    w2 = jnp.concatenate([top, bot], axis=0)                                 # (T+1, 2H)

    # one-hot constants from row-major tril indices (same order as torch.tril_indices)
    rows, cols = np.tril_indices(D)
    G = np.zeros((T, D), np.float32)
    G[np.arange(T), rows] = 1.0
    C = np.zeros((D, T), np.float32)
    C[cols, np.arange(T)] = 1.0
    # exact fold of the layer-2 bias b2m:  C @ (b2m * pg) == (C @ diag(b2m) @ G) @ p^T
    A = C @ np.diag(np.asarray(b2m, np.float32).reshape(-1)) @ G             # (D, D)
    Gaug = np.concatenate([G, A], axis=0).astype(np.float32)                 # (T+D, D)

    return {"w1": w1, "w2": w2, "Gaug": jnp.asarray(Gaug), "C": jnp.asarray(C)}


def reference_forward(x, params):
    """Pure numpy reference mirroring the PyTorch module exactly."""
    xn = np.asarray(x)
    w1v, b1v, w2v = map(np.asarray, (params["w1v"], params["b1v"], params["w2v"]))
    w1m, b1m, w2m, b2m = map(np.asarray,
                             (params["w1m"], params["b1m"], params["w2m"], params["b2m"]))
    B, two_d = xn.shape
    D = two_d // 2
    q, p = xn[:, :D], xn[:, D:]
    V = np.tanh(q @ w1v + b1v) @ w2v                                    # (B, 1)
    tri = np.tanh(q @ w1m + b1m) @ w2m + b2m                            # (B, T)
    rows, cols = np.tril_indices(D)
    m = np.zeros((B, D, D), np.float32)
    m[:, rows, cols] = tri
    M = m @ m.transpose(0, 2, 1) + 1e-5 * np.eye(D, dtype=np.float32)
    T = np.squeeze(p[:, None, :] @ M @ p[:, :, None], axis=-1)          # (B, 1)
    return V + T


if __name__ == "__main__":
    # shapes consistent with the module: in_dim=8 -> D=4, hidden=32
    IN_DIM = 8
    D = IN_DIM // 2
    HIDDEN = 32
    B = 256

    key = jax.random.PRNGKey(0)
    k_x, k_p = jax.random.split(key)
    x = jax.random.normal(k_x, (B, IN_DIM), jnp.float32)
    params = make_params(k_p, D, HIDDEN)
    packed = pack_params(params, D)

    out = constrained_hamiltonian(x, packed)
    out = jax.block_until_ready(out)

    ref = reference_forward(x, params)
    assert out.shape == (B, 1)
    np.testing.assert_allclose(np.asarray(out), ref, rtol=1e-4, atol=1e-4)
    print("KERNEL_OK")
</pallas_src>

<mosaic_0001>
module attributes {stable_mosaic.version = 11 : i64} {
  func.func @_hamiltonian_kernel(%arg0: i32, %arg1: memref<9x256xf32, #tpu.memory_space<vmem>>, %arg2: memref<64x9xf32, #tpu.memory_space<vmem>>, %arg3: memref<11x64xf32, #tpu.memory_space<vmem>>, %arg4: memref<14x4xf32, #tpu.memory_space<vmem>>, %arg5: memref<4x10xf32, #tpu.memory_space<vmem>>, %arg6: memref<1x256xf32, #tpu.memory_space<vmem>>) attributes {dimension_semantics = [#tpu.dimension_semantics<parallel>], iteration_bounds = array<i64: 1>, scalar_prefetch = 0 : i64, scratch_operands = 0 : i64, tpu.core_type = #tpu.core_type<tc>, window_params = [{transform_indices = @transform_0, window_bounds = array<i64: 9, 256>}, {pipeline_mode = #tpu.pipeline_mode<synchronous>, transform_indices = @transform_1, window_bounds = array<i64: 64, 9>}, {pipeline_mode = #tpu.pipeline_mode<synchronous>, transform_indices = @transform_2, window_bounds = array<i64: 11, 64>}, {pipeline_mode = #tpu.pipeline_mode<synchronous>, transform_indices = @transform_3, window_bounds = array<i64: 14, 4>}, {pipeline_mode = #tpu.pipeline_mode<synchronous>, transform_indices = @transform_4, window_bounds = array<i64: 4, 10>}, {transform_indices = @transform_5, window_bounds = array<i64: 1, 256>}]} {
    %c0 = arith.constant 0 : index
    %c0_0 = arith.constant 0 : index
    %0 = vector.load %arg1[%c0, %c0_0] : memref<9x256xf32, #tpu.memory_space<vmem>>, vector<9x256xf32>
    %1 = vector.extract_strided_slice %0 {offsets = [4, 0], sizes = [4, 256], strides = [1, 1]} : vector<9x256xf32> to vector<4x256xf32>
    %c0_1 = arith.constant 0 : index
    %c0_2 = arith.constant 0 : index
    %2 = vector.load %arg2[%c0_1, %c0_2] : memref<64x9xf32, #tpu.memory_space<vmem>>, vector<64x9xf32>
    %cst = arith.constant dense<0.000000e+00> : vector<64x256xf32>
    %3 = tpu.matmul %2, %0, %cst {dimension_numbers = #tpu.dot_dimension_numbers<[1], [0], [0], [1], [0, 0, 1, 1], [], []>} : vector<64x9xf32>, vector<9x256xf32>, vector<64x256xf32> -> vector<64x256xf32>
    %4 = math.tanh %3 : vector<64x256xf32>
    %c0_3 = arith.constant 0 : index
    %c0_4 = arith.constant 0 : index
    %5 = vector.load %arg3[%c0_3, %c0_4] : memref<11x64xf32, #tpu.memory_space<vmem>>, vector<11x64xf32>
    %cst_5 = arith.constant dense<0.000000e+00> : vector<11x256xf32>
    %6 = tpu.matmul %5, %4, %cst_5 {dimension_numbers = #tpu.dot_dimension_numbers<[1], [0], [0], [1], [0, 0, 1, 1], [], []>} : vector<11x64xf32>, vector<64x256xf32>, vector<11x256xf32> -> vector<11x256xf32>
    %7 = vector.extract_strided_slice %6 {offsets = [0, 0], sizes = [10, 256], strides = [1, 1]} : vector<11x256xf32> to vector<10x256xf32>
    %8 = vector.extract_strided_slice %6 {offsets = [10, 0], sizes = [1, 256], strides = [1, 1]} : vector<11x256xf32> to vector<1x256xf32>
    %c0_6 = arith.constant 0 : index
    %c0_7 = arith.constant 0 : index
    %9 = vector.load %arg4[%c0_6, %c0_7] : memref<14x4xf32, #tpu.memory_space<vmem>>, vector<14x4xf32>
    %cst_8 = arith.constant dense<0.000000e+00> : vector<14x256xf32>
    %10 = tpu.matmul %9, %1, %cst_8 {dimension_numbers = #tpu.dot_dimension_numbers<[1], [0], [0], [1], [0, 0, 1, 1], [], []>} : vector<14x4xf32>, vector<4x256xf32>, vector<14x256xf32> -> vector<14x256xf32>
    %11 = vector.extract_strided_slice %10 {offsets = [0, 0], sizes = [10, 256], strides = [1, 1]} : vector<14x256xf32> to vector<10x256xf32>
    %12 = vector.extract_strided_slice %10 {offsets = [10, 0], sizes = [4, 256], strides = [1, 1]} : vector<14x256xf32> to vector<4x256xf32>
    %c0_9 = arith.constant 0 : index
    %c0_10 = arith.constant 0 : index
    %13 = vector.load %arg5[%c0_9, %c0_10] : memref<4x10xf32, #tpu.memory_space<vmem>>, vector<4x10xf32>
    %14 = arith.mulf %7, %11 : vector<10x256xf32>
    %cst_11 = arith.constant dense<0.000000e+00> : vector<4x256xf32>
    %15 = tpu.matmul %13, %14, %cst_11 {dimension_numbers = #tpu.dot_dimension_numbers<[1], [0], [0], [1], [0, 0, 1, 1], [], []>} : vector<4x10xf32>, vector<10x256xf32>, vector<4x256xf32> -> vector<4x256xf32>
    %16 = arith.addf %15, %12 : vector<4x256xf32>
    %17 = arith.mulf %16, %16 : vector<4x256xf32>
    %cst_12 = arith.constant dense<0.000000e+00> : vector<256xf32>
    %18 = vector.multi_reduction <add>, %17, %cst_12 [0] : vector<4x256xf32> to vector<256xf32>
    %19 = vector.shape_cast %18 : vector<256xf32> to vector<1x256xf32>
    %20 = arith.mulf %1, %1 : vector<4x256xf32>
    %cst_13 = arith.constant dense<0.000000e+00> : vector<256xf32>
    %21 = vector.multi_reduction <add>, %20, %cst_13 [0] : vector<4x256xf32> to vector<256xf32>
    %22 = vector.shape_cast %21 : vector<256xf32> to vector<1x256xf32>
    %cst_14 = arith.constant 9.99999974E-6 : f32
    %23 = vector.broadcast %cst_14 : f32 to vector<1x256xf32>
    %24 = arith.mulf %23, %22 : vector<1x256xf32>
    %25 = arith.addf %19, %24 : vector<1x256xf32>
    %26 = arith.addf %8, %25 : vector<1x256xf32>
    %c0_15 = arith.constant 0 : index
    %c0_16 = arith.constant 0 : index
    %27 = vector.load %arg6[%c0_15, %c0_16] : memref<1x256xf32, #tpu.memory_space<vmem>>, vector<1x256xf32>
    tpu.vector_store %arg6[%c0_15, %c0_16], %26 {strides = array<i32>} : memref<1x256xf32, #tpu.memory_space<vmem>>, vector<1x256xf32>,
    return
  }
  func.func @transform_0(%arg0: i32) -> (i32, i32) {
    %c0_i32 = arith.constant 0 : i32
    %c0_i32_0 = arith.constant 0 : i32
    return %c0_i32, %arg0 : i32, i32
  }
  func.func @transform_1(%arg0: i32) -> (i32, i32) {
    %c0_i32 = arith.constant 0 : i32
    %c0_i32_0 = arith.constant 0 : i32
    %c0_i32_1 = arith.constant 0 : i32
    return %c0_i32, %c0_i32_0 : i32, i32
  }
  func.func @transform_2(%arg0: i32) -> (i32, i32) {
    %c0_i32 = arith.constant 0 : i32
    %c0_i32_0 = arith.constant 0 : i32
    %c0_i32_1 = arith.constant 0 : i32
    return %c0_i32, %c0_i32_0 : i32, i32
  }
  func.func @transform_3(%arg0: i32) -> (i32, i32) {
    %c0_i32 = arith.constant 0 : i32
    %c0_i32_0 = arith.constant 0 : i32
    %c0_i32_1 = arith.constant 0 : i32
    return %c0_i32, %c0_i32_0 : i32, i32
  }
  func.func @transform_4(%arg0: i32) -> (i32, i32) {
    %c0_i32 = arith.constant 0 : i32
    %c0_i32_0 = arith.constant 0 : i32
    %c0_i32_1 = arith.constant 0 : i32
    return %c0_i32, %c0_i32_0 : i32, i32
  }
  func.func @transform_5(%arg0: i32) -> (i32, i32) {
    %c0_i32 = arith.constant 0 : i32
    %c0_i32_0 = arith.constant 0 : i32
    return %c0_i32, %arg0 : i32, i32
  }
}

</mosaic_0001>

<llo_original>
// kernel: tpu_custom_call.1
$region0: #{tpu_custom_call.1}
  #allocation0 [shape = 'u32[]', space=smem, size = 0x4, offset = 0x4, fixed_abs, tag = 'smem constant byte address 0x4 - core index']
  #allocation1 [shape = 'u32[72,128]{1,0:T(1,128)}', space=vmem, size = 0x9000, scoped, tag = 'internal scratch']
  %s0 = inlined_call_operand.vmem [shape: f32[9,256], index: 0, kind: input, shape index: {}]
  %s1 = inlined_call_operand.vmem [shape: f32[64,9], index: 1, kind: input, shape index: {}]
  %s2 = inlined_call_operand.vmem [shape: f32[11,64], index: 2, kind: input, shape index: {}]
  %s3 = inlined_call_operand.vmem [shape: f32[14,4], index: 3, kind: input, shape index: {}]
  %s4 = inlined_call_operand.vmem [shape: f32[4,10], index: 4, kind: input, shape index: {}]
  %s5 = inlined_call_operand.hbm [shape: f32[1,256], index: 5, kind: output, shape index: {}]
  %s6 = sld [smem:[#allocation0]]
  $region30: #{tpu_custom_call.1} parent=0
    _
  %s8 = ssub.s32 1, %s6
  %s9 = scalar_select 0, %s8, %s6
  $region1: #{tpu_custom_call.1} parent=0
    #allocation2 [shape = 'u8[1024]{0}', space=vmem, size = 0x400, scoped, tag = 'output window, operand 0, single buffered']
    #allocation3 [shape = 's32[1]{0}', space=sflag, size = 0x4, scoped, tag = 'scoped memory for tpu_custom_call.1']
    %10 = vsyncpa [#allocation3], 0
    // Predicated region
    $region2: #{tpu_custom_call.1} parent=1 // pred_check
      _
    $region3: #{tpu_custom_call.1} parent=1 // pred_check_branch
      %12 = sbr.rel (0) target = $region5
    $region4: #{tpu_custom_call.1} parent=1 // pred_region
      _
    $region5: #{tpu_custom_call.1} parent=1 // pred_fallthru
      _
    // Predicated region
    $region6: #{tpu_custom_call.1} parent=1 // pred_check
      _
    $region7: #{tpu_custom_call.1} parent=1 // pred_check_branch
      %14 = sbr.rel (0) target = $region9
    $region8: #{tpu_custom_call.1} parent=1 // pred_region
      _
    $region9: #{tpu_custom_call.1} parent=1 // pred_fallthru
      _
    // Predicated region
    $region10: #{tpu_custom_call.1} parent=1 // pred_check
      _
    $region11: #{tpu_custom_call.1} parent=1 // pred_check_branch
      %16 = sbr.rel (0) target = $region13
    $region12: #{tpu_custom_call.1} parent=1 // pred_region
      _
    $region13: #{tpu_custom_call.1} parent=1 // pred_fallthru
      _
    // Predicated region
    $region14: #{tpu_custom_call.1} parent=1 // pred_check
      _
    $region15: #{tpu_custom_call.1} parent=1 // pred_check_branch
      %18 = sbr.rel (0) target = $region17
    $region16: #{tpu_custom_call.1} parent=1 // pred_region
      _
    $region17: #{tpu_custom_call.1} parent=1 // pred_fallthru
      _
    // Predicated region
    $region18: #{tpu_custom_call.1} parent=1 // pred_check
      _
    $region19: #{tpu_custom_call.1} parent=1 // pred_check_branch
      %20 = sbr.rel (0) target = $region21
    $region20: #{tpu_custom_call.1} parent=1 // pred_region
      _
    $region21: #{tpu_custom_call.1} parent=1 // pred_fallthru
      _
    %v21 = vld [vmem:[%s0] sm:$0xff]
    %v22 = vld [vmem:[%s0 + $0x8] sm:$0xff]
    %v23 = vld [vmem:[%s0 + $0x10] sm:$0x1]
    %v24 = vld [vmem:[%s0 + $0x18] sm:$0x1]
    %v25 = vld [vmem:[%s1] sm:$0xff]
    %v26 = vld [vmem:[%s1 + $0x8] sm:$0xff]
    %v27 = vld [vmem:[%s1 + $0x10] sm:$0xff]
    %v28 = vld [vmem:[%s1 + $0x18] sm:$0xff]
    %v29 = vld [vmem:[%s1 + $0x20] sm:$0xff]
    %v30 = vld [vmem:[%s1 + $0x28] sm:$0xff]
    %v31 = vld [vmem:[%s1 + $0x30] sm:$0xff]
    %v32 = vld [vmem:[%s1 + $0x38] sm:$0xff]
    %vm33 = vcmask 72704
    %v35 = vsel %vm33, %v25, 0
    %v38 = vsel %vm33, %v26, 0
    %v41 = vsel %vm33, %v27, 0
    %v44 = vsel %vm33, %v28, 0
    %v47 = vsel %vm33, %v29, 0
    %v50 = vsel %vm33, %v30, 0
    %v53 = vsel %vm33, %v31, 0
    %v56 = vsel %vm33, %v32, 0
    %vm58 = vcmask 1040384
    %v60 = vsel %vm58, %v23, 0
    %v63 = vsel %vm58, %v24, 0
    %65 = vmatpush.msra.mxu0 0.0
    %66 = vmatpush.msra.mxu0 0.0
    %67 = vmatpush.msra.mxu0 0.0
    %68 = vmatpush.msra.mxu0 0.0
    %69 = vmatpush.msra.mxu0 0.0
    %70 = vmatpush.msra.mxu0 0.0
    %71 = vmatpush.msra.mxu0 0.0
    %72 = vmatpush.msra.mxu0 0.0
    %73 = vmatpush.msra.mxu0 0.0
    %74 = vmatpush.msra.mxu0 0.0
    %75 = vmatpush.msra.mxu0 0.0
    %76 = vmatpush.msra.mxu0 0.0
    %77 = vmatpush.msra.mxu0 0.0
    %78 = vmatpush.msra.mxu0 0.0
    %79 = vmatpush.msra.mxu0 %v60
    %80 = vmatpush.msra.mxu0 %v21
    %81 = vmatmul.f32.gmra.mxu0 %v35
    %v82 = vpop.f32.mrf.mxu0
    %v83 = vadd.f32 0.0, %v82
    %84 = vmatmul.f32.gmra.mxu0 %v38
    %v85 = vpop.f32.mrf.mxu0
    %v86 = vadd.f32 0.0, %v85
    %87 = vmatmul.f32.gmra.mxu0 %v41
    %v88 = vpop.f32.mrf.mxu0
    %v89 = vadd.f32 0.0, %v88
    %90 = vmatmul.f32.gmra.mxu0 %v44
    %v91 = vpop.f32.mrf.mxu0
    %v92 = vadd.f32 0.0, %v91
    %93 = vmatmul.f32.gmra.mxu0 %v47
    %v94 = vpop.f32.mrf.mxu0
    %v95 = vadd.f32 0.0, %v94
    %96 = vmatmul.f32.gmra.mxu0 %v50
    %v97 = vpop.f32.mrf.mxu0
    %v98 = vadd.f32 0.0, %v97
    %99 = vmatmul.f32.gmra.mxu0 %v53
    %v100 = vpop.f32.mrf.mxu0
    %v101 = vadd.f32 0.0, %v100
    %102 = vmatmul.f32.gmra.mxu0 %v56
    %v103 = vpop.f32.mrf.mxu0
    %v104 = vadd.f32 0.0, %v103
    %105 = vdwg.mxu0
    %106 = vmatpush.msra.mxu0 0.0
    %107 = vmatpush.msra.mxu0 0.0
    %108 = vmatpush.msra.mxu0 0.0
    %109 = vmatpush.msra.mxu0 0.0
    %110 = vmatpush.msra.mxu0 0.0
    %111 = vmatpush.msra.mxu0 0.0
    %112 = vmatpush.msra.mxu0 0.0
    %113 = vmatpush.msra.mxu0 0.0
    %114 = vmatpush.msra.mxu0 0.0
    %115 = vmatpush.msra.mxu0 0.0
    %116 = vmatpush.msra.mxu0 0.0
    %117 = vmatpush.msra.mxu0 0.0
    %118 = vmatpush.msra.mxu0 0.0
    %119 = vmatpush.msra.mxu0 0.0
    %120 = vmatpush.msra.mxu0 %v63
    %121 = vmatpush.msra.mxu0 %v22
    %122 = vmatmul.f32.gmra.mxu0 %v35
    %v123 = vpop.f32.mrf.mxu0
    %v124 = vadd.f32 0.0, %v123
    %125 = vmatmul.f32.gmra.mxu0 %v38
    %v126 = vpop.f32.mrf.mxu0
    %v127 = vadd.f32 0.0, %v126
    %128 = vmatmul.f32.gmra.mxu0 %v41
    %v129 = vpop.f32.mrf.mxu0
    %v130 = vadd.f32 0.0, %v129
    %131 = vmatmul.f32.gmra.mxu0 %v44
    %v132 = vpop.f32.mrf.mxu0
    %v133 = vadd.f32 0.0, %v132
    %134 = vmatmul.f32.gmra.mxu0 %v47
    %v135 = vpop.f32.mrf.mxu0
    %v136 = vadd.f32 0.0, %v135
    %137 = vmatmul.f32.gmra.mxu0 %v50
    %v138 = vpop.f32.mrf.mxu0
    %v139 = vadd.f32 0.0, %v138
    %140 = vmatmul.f32.gmra.mxu0 %v53
    %v141 = vpop.f32.mrf.mxu0
    %v142 = vadd.f32 0.0, %v141
    %143 = vmatmul.f32.gmra.mxu0 %v56
    %v144 = vpop.f32.mrf.mxu0
    %v145 = vadd.f32 0.0, %v144
    %146 = vdwg.mxu0
    %v147 = vtanh.pop %v83
    %v148 = vtanh.pop %v124
    %v149 = vtanh.pop %v86
    %v150 = vtanh.pop %v127
    %v151 = vtanh.pop %v89
    %v152 = vtanh.pop %v130
    %v153 = vtanh.pop %v92
    %v154 = vtanh.pop %v133
    %v155 = vtanh.pop %v95
    %v156 = vtanh.pop %v136
    %v157 = vtanh.pop %v98
    %v158 = vtanh.pop %v139
    %v159 = vtanh.pop %v101
    %v160 = vtanh.pop %v142
    %v161 = vtanh.pop %v104
    %v162 = vtanh.pop %v145
    %v163 = vld [vmem:[%s2] sm:$0xff]
    %v164 = vld [vmem:[%s2 + $0x8] sm:$0x7]
    %vm165 = vcmask 523264
    %v167 = vsel %vm165, %v163, 0
    %v170 = vsel %vm165, %v164, 0
    %172 = vmatpush.msra.mxu0 0.0
    %173 = vmatpush.msra.mxu0 0.0
    %174 = vmatpush.msra.mxu0 0.0
    %175 = vmatpush.msra.mxu0 0.0
    %176 = vmatpush.msra.mxu0 0.0
    %177 = vmatpush.msra.mxu0 0.0
    %178 = vmatpush.msra.mxu0 0.0
    %179 = vmatpush.msra.mxu0 0.0
    %180 = vmatpush.msra.mxu0 %v161
    %181 = vmatpush.msra.mxu0 %v159
    %182 = vmatpush.msra.mxu0 %v157
    %183 = vmatpush.msra.mxu0 %v155
    %184 = vmatpush.msra.mxu0 %v153
    %185 = vmatpush.msra.mxu0 %v151
    %186 = vmatpush.msra.mxu0 %v149
    %187 = vmatpush.msra.mxu0 %v147
    %188 = vmatmul.f32.gmra.mxu0 %v167
    %v189 = vpop.f32.mrf.mxu0
    %v190 = vadd.f32 0.0, %v189
    %191 = vmatmul.f32.gmra.mxu0 %v170
    %v192 = vpop.f32.mrf.mxu0
    %v193 = vadd.f32 0.0, %v192
    %194 = vdwg.mxu0
    %195 = vmatpush.msra.mxu0 0.0
    %196 = vmatpush.msra.mxu0 0.0
    %197 = vmatpush.msra.mxu0 0.0
    %198 = vmatpush.msra.mxu0 0.0
    %199 = vmatpush.msra.mxu0 0.0
    %200 = vmatpush.msra.mxu0 0.0
    %201 = vmatpush.msra.mxu0 0.0
    %202 = vmatpush.msra.mxu0 0.0
    %203 = vmatpush.msra.mxu0 %v162
    %204 = vmatpush.msra.mxu0 %v160
    %205 = vmatpush.msra.mxu0 %v158
    %206 = vmatpush.msra.mxu0 %v156
    %207 = vmatpush.msra.mxu0 %v154
    %208 = vmatpush.msra.mxu0 %v152
    %209 = vmatpush.msra.mxu0 %v150
    %210 = vmatpush.msra.mxu0 %v148
    %211 = vmatmul.f32.gmra.mxu0 %v167
    %v212 = vpop.f32.mrf.mxu0
    %v213 = vadd.f32 0.0, %v212
    %214 = vmatmul.f32.gmra.mxu0 %v170
    %v215 = vpop.f32.mrf.mxu0
    %v216 = vadd.f32 0.0, %v215
    %217 = vdwg.mxu0
    %v218 = vld [vmem:[%s3] sm:$0xff]
    %v219 = vld [vmem:[%s3 + $0x8] sm:$0x3f]
    %v222 = vrot.slane %v21, 4
    %v223 = vrot.slane %v22, 4
    %vm224 = vcmask 31744
    %v226 = vsel %vm224, %v218, 0
    %v229 = vsel %vm224, %v219, 0
    %vm231 = vcmask 1043456
    %v232 = vsel %vm231, %v222, 0
    %v234 = vsel %vm231, %v223, 0
    %236 = vmatpush.msra.mxu0 0.0
    %237 = vmatpush.msra.mxu0 0.0
    %238 = vmatpush.msra.mxu0 0.0
    %239 = vmatpush.msra.mxu0 0.0
    %240 = vmatpush.msra.mxu0 0.0
    %241 = vmatpush.msra.mxu0 0.0
    %242 = vmatpush.msra.mxu0 0.0
    %243 = vmatpush.msra.mxu0 0.0
    %244 = vmatpush.msra.mxu0 0.0
    %245 = vmatpush.msra.mxu0 0.0
    %246 = vmatpush.msra.mxu0 0.0
    %247 = vmatpush.msra.mxu0 0.0
    %248 = vmatpush.msra.mxu0 0.0
    %249 = vmatpush.msra.mxu0 0.0
    %250 = vmatpush.msra.mxu0 0.0
    %251 = vmatpush.msra.mxu0 %v232
    %252 = vmatmul.f32.gmra.mxu0 %v226
    %v253 = vpop.f32.mrf.mxu0
    %v254 = vadd.f32 0.0, %v253
    %255 = vmatmul.f32.gmra.mxu0 %v229
    %v256 = vpop.f32.mrf.mxu0
    %v257 = vadd.f32 0.0, %v256
    %258 = vdwg.mxu0
    %259 = vmatpush.msra.mxu0 0.0
    %260 = vmatpush.msra.mxu0 0.0
    %261 = vmatpush.msra.mxu0 0.0
    %262 = vmatpush.msra.mxu0 0.0
    %263 = vmatpush.msra.mxu0 0.0
    %264 = vmatpush.msra.mxu0 0.0
    %265 = vmatpush.msra.mxu0 0.0
    %266 = vmatpush.msra.mxu0 0.0
    %267 = vmatpush.msra.mxu0 0.0
    %268 = vmatpush.msra.mxu0 0.0
    %269 = vmatpush.msra.mxu0 0.0
    %270 = vmatpush.msra.mxu0 0.0
    %271 = vmatpush.msra.mxu0 0.0
    %272 = vmatpush.msra.mxu0 0.0
    %273 = vmatpush.msra.mxu0 0.0
    %274 = vmatpush.msra.mxu0 %v234
    %275 = vmatmul.f32.gmra.mxu0 %v226
    %v276 = vpop.f32.mrf.mxu0
    %v277 = vadd.f32 0.0, %v276
    %278 = vmatmul.f32.gmra.mxu0 %v229
    %v279 = vpop.f32.mrf.mxu0
    %v280 = vadd.f32 0.0, %v279
    %281 = vdwg.mxu0
    %v282 = vld [vmem:[%s4] sm:$0xf]
    %v283 = vmul.f32 %v190, %v254
    %v284 = vmul.f32 %v213, %v277
    %v285 = vmul.f32 %v193, %v257
    %v286 = vmul.f32 %v216, %v280
    %v289 = vrot.slane %v257, 2
    %v290 = vrot.slane %v280, 2
    %vm293 = vcmask 80896
    %v295 = vsel %vm293, %v282, 0
    %vm297 = vcmask 1041408
    %v299 = vsel %vm297, %v285, 0
    %v302 = vsel %vm297, %v286, 0
    %304 = vmatpush.msra.mxu0 0.0
    %305 = vmatpush.msra.mxu0 0.0
    %306 = vmatpush.msra.mxu0 0.0
    %307 = vmatpush.msra.mxu0 0.0
    %308 = vmatpush.msra.mxu0 0.0
    %309 = vmatpush.msra.mxu0 0.0
    %310 = vmatpush.msra.mxu0 0.0
    %311 = vmatpush.msra.mxu0 0.0
    %312 = vmatpush.msra.mxu0 0.0
    %313 = vmatpush.msra.mxu0 0.0
    %314 = vmatpush.msra.mxu0 0.0
    %315 = vmatpush.msra.mxu0 0.0
    %316 = vmatpush.msra.mxu0 0.0
    %317 = vmatpush.msra.mxu0 0.0
    %318 = vmatpush.msra.mxu0 %v299
    %319 = vmatpush.msra.mxu0 %v283
    %320 = vmatmul.f32.gmra.mxu0 %v295
    %v321 = vpop.f32.mrf.mxu0
    %v322 = vadd.f32 %v289, %v321
    %323 = vdwg.mxu0
    %324 = vmatpush.msra.mxu0 0.0
    %325 = vmatpush.msra.mxu0 0.0
    %326 = vmatpush.msra.mxu0 0.0
    %327 = vmatpush.msra.mxu0 0.0
    %328 = vmatpush.msra.mxu0 0.0
    %329 = vmatpush.msra.mxu0 0.0
    %330 = vmatpush.msra.mxu0 0.0
    %331 = vmatpush.msra.mxu0 0.0
    %332 = vmatpush.msra.mxu0 0.0
    %333 = vmatpush.msra.mxu0 0.0
    %334 = vmatpush.msra.mxu0 0.0
    %335 = vmatpush.msra.mxu0 0.0
    %336 = vmatpush.msra.mxu0 0.0
    %337 = vmatpush.msra.mxu0 0.0
    %338 = vmatpush.msra.mxu0 %v302
    %339 = vmatpush.msra.mxu0 %v284
    %340 = vmatmul.f32.gmra.mxu0 %v295
    %v341 = vpop.f32.mrf.mxu0
    %v342 = vadd.f32 %v290, %v341
    %343 = vdwg.mxu0
    %v344 = vmul.f32 %v322, %v322
    %v345 = vmul.f32 %v342, %v342
    %v346 = vsel %vm231, %v344, 0.0
    %v347 = vrot.slane %v346, 4
    %v348 = vadd.f32 %v346, %v347
    %v349 = vrot.slane %v348, 2
    %v350 = vadd.f32 %v348, %v349
    %v351 = vrot.slane %v350, 1
    %v352 = vadd.f32 %v350, %v351
    %v353 = vsel %vm231, %v345, 0.0
    %v354 = vrot.slane %v353, 4
    %v355 = vadd.f32 %v353, %v354
    %v356 = vrot.slane %v355, 2
    %v357 = vadd.f32 %v355, %v356
    %v358 = vrot.slane %v357, 1
    %v359 = vadd.f32 %v357, %v358
    %v360 = vmul.f32 %v21, %v21
    %v361 = vmul.f32 %v22, %v22
    %v364 = vrot.slane %v360, 4
    %v365 = vrot.slane %v361, 4
    %v368 = vsel %vm231, %v364, 0.0
    %v369 = vrot.slane %v368, 4
    %v370 = vadd.f32 %v368, %v369
    %v371 = vrot.slane %v370, 2
    %v372 = vadd.f32 %v370, %v371
    %v373 = vrot.slane %v372, 1
    %v374 = vadd.f32 %v372, %v373
    %v375 = vsel %vm231, %v365, 0.0
    %v376 = vrot.slane %v375, 4
    %v377 = vadd.f32 %v375, %v376
    %v378 = vrot.slane %v377, 2
    %v379 = vadd.f32 %v377, %v378
    %v380 = vrot.slane %v379, 1
    %v381 = vadd.f32 %v379, %v380
    %v382 = vmul.f32 %v374, 1e-05
    %v383 = vmul.f32 %v381, 1e-05
    %v384 = vadd.f32 %v352, %v382
    %v385 = vadd.f32 %v359, %v383
    %v386 = vadd.f32 %v193, %v384
    %v387 = vadd.f32 %v216, %v385
    %390 = vst [vmem:[#allocation1] sm:$0xff] %v386
    %391 = vst [vmem:[#allocation1 + $0x9] sm:$0xff] %v387
    %s392 = scalar_lea.vmem [#allocation1], 2
    %v393 = vld [vmem:[%s392] ss:$9 sm:$0xff]
    %v395 = vlaneseq
    %vm396 = vcmp.ge.s32.totalorder %v395, 0
    %vm397 = vcmp.lt.s32.totalorder %v395, 256
    %vm398 = vmand %vm396, %vm397
    %399 = vst.msk [vmem:[#allocation2] sm:$0x3] %vm398, %v393
    // Predicated region
    $region22: #{tpu_custom_call.1} parent=1 // pred_check
      _
    $region23: #{tpu_custom_call.1} parent=1 // pred_check_branch
      %401 = sbr.rel (0) target = $region25
    $region24: #{tpu_custom_call.1} parent=1 // pred_region
      %403 = vsyncadd [#allocation3], 0
      %s405 = sshll.u32 [#allocation2], 4
      %s406 = int_to_ptr.vmem [resolvable:$true] %s405
      %s407 = sshll.u32 %s5, 4
      %s408 = int_to_ptr.hbm [resolvable:$true] %s407
      %410 = dma.vmem_to_hbm [thread:$0]  %s406, 32, %s408, [#allocation3]
    $region25: #{tpu_custom_call.1} parent=1 // pred_fallthru
      _
    // Predicated region
    $region26: #{tpu_custom_call.1} parent=1 // pred_check
      _
    $region27: #{tpu_custom_call.1} parent=1 // pred_check_branch
      %412 = sbr.rel (0) target = $region29
    $region28: #{tpu_custom_call.1} parent=1 // pred_region
      %414 = dma.done [#allocation3], 32
    $region29: #{tpu_custom_call.1} parent=1 // pred_fallthru
      _
    %415 = vsyncpa [#allocation3], 1

</llo_original>
